<compile_context>
chip_gen: v7x
topology: tpu7x:2x2x1
jax: 0.10.0
libtpu: 0.0.40
codegen_flags: <defaults>
</compile_context>

<pallas_src>
import jax
import jax.numpy as jnp
from jax.experimental import pallas as pl
from jax.experimental.pallas import tpu as pltpu

INPUT_SIZE = 8
HIDDEN_SIZE = 32
EMBED_SIZE = 16


def _round_up(x: int, m: int) -> int:
    return ((x + m - 1) // m) * m


def music_encoder_kernel(xt_ref, w1t_ref, b1_ref, w2t_ref, b2_ref, ot_ref):
    # xt_ref : (INPUT_SIZE,  TB)   batch on lanes
    # w1t_ref: (HIDDEN_SIZE, INPUT_SIZE)
    # b1_ref : (HIDDEN_SIZE, 1)
    # w2t_ref: (EMBED_SIZE,  HIDDEN_SIZE)
    # b2_ref : (EMBED_SIZE,  1)
    # ot_ref : (EMBED_SIZE,  TB)
    xt = xt_ref[...]

    h = jnp.dot(w1t_ref[...], xt, preferred_element_type=jnp.float32)
    h = h + b1_ref[...]                 # broadcast (H,1) over lanes
    h = jnp.maximum(h, 0.0)             # ReLU

    y = jnp.dot(w2t_ref[...], h, preferred_element_type=jnp.float32)
    y = y + b2_ref[...]
    ot_ref[...] = jnp.tanh(y)           # Tanh (EUP)


def music_encoder(x, w1, b1, w2, b2, *, batch_tile: int = 1024):
    """x: (B, input_size); w1: (input_size, hidden); b1: (hidden,);
       w2: (hidden, embed); b2: (embed,). Returns (B, embed) f32."""
    B = x.shape[0]

    # Lane-dense batch tile: a multiple of 128, capped at `batch_tile`.
    TB = min(batch_tile, _round_up(B, 128))
    B_pad = _round_up(B, TB)

    # Transpose activations so batch sits on the lane axis; pre-transpose the
    # tiny weights in the wrapper (outside the kernel hot path).
    xt = x.T                                       # (INPUT_SIZE, B)
    if B_pad != B:
        xt = jnp.pad(xt, ((0, 0), (0, B_pad - B)))
    w1t = w1.T                                     # (HIDDEN_SIZE, INPUT_SIZE)
    w2t = w2.T                                     # (EMBED_SIZE, HIDDEN_SIZE)
    b1c = b1.reshape(-1, 1)                        # (HIDDEN_SIZE, 1)
    b2c = b2.reshape(-1, 1)                        # (EMBED_SIZE, 1)

    grid = (B_pad // TB,)

    out_t = pl.pallas_call(
        music_encoder_kernel,
        out_shape=jax.ShapeDtypeStruct((EMBED_SIZE, B_pad), jnp.float32),
        grid_spec=pl.GridSpec(
            grid=grid,
            in_specs=[
                # Activations: tiled along the (lane) batch axis.
                pl.BlockSpec((INPUT_SIZE, TB), lambda i: (0, i)),
                # Weights / biases: constant index_map -> resident across steps.
                pl.BlockSpec((HIDDEN_SIZE, INPUT_SIZE), lambda i: (0, 0)),
                pl.BlockSpec((HIDDEN_SIZE, 1), lambda i: (0, 0)),
                pl.BlockSpec((EMBED_SIZE, HIDDEN_SIZE), lambda i: (0, 0)),
                pl.BlockSpec((EMBED_SIZE, 1), lambda i: (0, 0)),
            ],
            out_specs=pl.BlockSpec((EMBED_SIZE, TB), lambda i: (0, i)),
        ),
        compiler_params=pltpu.CompilerParams(
            dimension_semantics=("parallel",)),   # 2 TCs on v7x; no-op v5e/v6e
    )(xt, w1t, b1c, w2t, b2c)

    # Back to PyTorch convention (B, embed); drop batch padding.
    return out_t[:, :B].T


def reference(x, w1, b1, w2, b2):
    h = jnp.maximum(x @ w1 + b1[None, :], 0.0)
    return jnp.tanh(h @ w2 + b2[None, :])


if __name__ == "__main__":
    key = jax.random.PRNGKey(0)
    kx, k1, k2, k3, k4 = jax.random.split(key, 5)

    batch = 4
    # Deterministic synthetic parameters (PyTorch nn.Linear-ish scale).
    x = jax.random.normal(kx, (batch, INPUT_SIZE), dtype=jnp.float32)
    w1 = jax.random.uniform(k1, (INPUT_SIZE, HIDDEN_SIZE), dtype=jnp.float32,
                            minval=-1.0, maxval=1.0) / jnp.sqrt(INPUT_SIZE)
    b1 = jax.random.uniform(k2, (HIDDEN_SIZE,), dtype=jnp.float32,
                            minval=-1.0, maxval=1.0) / jnp.sqrt(INPUT_SIZE)
    w2 = jax.random.uniform(k3, (HIDDEN_SIZE, EMBED_SIZE), dtype=jnp.float32,
                            minval=-1.0, maxval=1.0) / jnp.sqrt(HIDDEN_SIZE)
    b2 = jax.random.uniform(k4, (EMBED_SIZE,), dtype=jnp.float32,
                            minval=-1.0, maxval=1.0) / jnp.sqrt(HIDDEN_SIZE)

    out = music_encoder(x, w1, b1, w2, b2)
    out = jax.block_until_ready(out)

    ref = reference(x, w1, b1, w2, b2)
    assert out.shape == (batch, EMBED_SIZE)
    assert jnp.allclose(out, ref, atol=1e-5, rtol=1e-5)

    # Also exercise a batch that actually tiles / needs padding.
    big_b = 300
    xb = jax.random.normal(kx, (big_b, INPUT_SIZE), dtype=jnp.float32)
    out_b = jax.block_until_ready(music_encoder(xb, w1, b1, w2, b2))
    ref_b = reference(xb, w1, b1, w2, b2)
    assert out_b.shape == (big_b, EMBED_SIZE)
    assert jnp.allclose(out_b, ref_b, atol=1e-5, rtol=1e-5)

    print("KERNEL_OK")
</pallas_src>

<mosaic_0001>
module attributes {stable_mosaic.version = 11 : i64} {
  func.func @music_encoder_kernel(%arg0: i32, %arg1: memref<8x128xf32, #tpu.memory_space<vmem>>, %arg2: memref<32x8xf32, #tpu.memory_space<vmem>>, %arg3: memref<32x1xf32, #tpu.memory_space<vmem>>, %arg4: memref<16x32xf32, #tpu.memory_space<vmem>>, %arg5: memref<16x1xf32, #tpu.memory_space<vmem>>, %arg6: memref<16x128xf32, #tpu.memory_space<vmem>>) attributes {dimension_semantics = [#tpu.dimension_semantics<parallel>], iteration_bounds = array<i64: 1>, scalar_prefetch = 0 : i64, scratch_operands = 0 : i64, tpu.core_type = #tpu.core_type<tc>, window_params = [{transform_indices = @transform_0, window_bounds = array<i64: 8, 128>}, {pipeline_mode = #tpu.pipeline_mode<synchronous>, transform_indices = @transform_1, window_bounds = array<i64: 32, 8>}, {pipeline_mode = #tpu.pipeline_mode<synchronous>, transform_indices = @transform_2, window_bounds = array<i64: 32, 1>}, {pipeline_mode = #tpu.pipeline_mode<synchronous>, transform_indices = @transform_3, window_bounds = array<i64: 16, 32>}, {pipeline_mode = #tpu.pipeline_mode<synchronous>, transform_indices = @transform_4, window_bounds = array<i64: 16, 1>}, {transform_indices = @transform_5, window_bounds = array<i64: 16, 128>}]} {
    %c0 = arith.constant 0 : index
    %c0_0 = arith.constant 0 : index
    %0 = vector.load %arg1[%c0, %c0_0] : memref<8x128xf32, #tpu.memory_space<vmem>>, vector<8x128xf32>
    %c0_1 = arith.constant 0 : index
    %c0_2 = arith.constant 0 : index
    %1 = vector.load %arg2[%c0_1, %c0_2] : memref<32x8xf32, #tpu.memory_space<vmem>>, vector<32x8xf32>
    %cst = arith.constant dense<0.000000e+00> : vector<32x128xf32>
    %2 = tpu.matmul %1, %0, %cst {dimension_numbers = #tpu.dot_dimension_numbers<[1], [0], [0], [1], [0, 0, 1, 1], [], []>} : vector<32x8xf32>, vector<8x128xf32>, vector<32x128xf32> -> vector<32x128xf32>
    %c0_3 = arith.constant 0 : index
    %c0_4 = arith.constant 0 : index
    %3 = vector.load %arg3[%c0_3, %c0_4] : memref<32x1xf32, #tpu.memory_space<vmem>>, vector<32x1xf32>
    %4 = vector.broadcast %3 : vector<32x1xf32> to vector<32x128xf32>
    %5 = arith.addf %2, %4 : vector<32x128xf32>
    %cst_5 = arith.constant 0.000000e+00 : f32
    %6 = vector.broadcast %cst_5 : f32 to vector<32x128xf32>
    %7 = arith.maximumf %5, %6 : vector<32x128xf32>
    %c0_6 = arith.constant 0 : index
    %c0_7 = arith.constant 0 : index
    %8 = vector.load %arg4[%c0_6, %c0_7] : memref<16x32xf32, #tpu.memory_space<vmem>>, vector<16x32xf32>
    %cst_8 = arith.constant dense<0.000000e+00> : vector<16x128xf32>
    %9 = tpu.matmul %8, %7, %cst_8 {dimension_numbers = #tpu.dot_dimension_numbers<[1], [0], [0], [1], [0, 0, 1, 1], [], []>} : vector<16x32xf32>, vector<32x128xf32>, vector<16x128xf32> -> vector<16x128xf32>
    %c0_9 = arith.constant 0 : index
    %c0_10 = arith.constant 0 : index
    %10 = vector.load %arg5[%c0_9, %c0_10] : memref<16x1xf32, #tpu.memory_space<vmem>>, vector<16x1xf32>
    %11 = vector.broadcast %10 : vector<16x1xf32> to vector<16x128xf32>
    %12 = arith.addf %9, %11 : vector<16x128xf32>
    %13 = math.tanh %12 : vector<16x128xf32>
    %c0_11 = arith.constant 0 : index
    %c0_12 = arith.constant 0 : index
    %14 = vector.load %arg6[%c0_11, %c0_12] : memref<16x128xf32, #tpu.memory_space<vmem>>, vector<16x128xf32>
    tpu.vector_store %arg6[%c0_11, %c0_12], %13 {strides = array<i32>} : memref<16x128xf32, #tpu.memory_space<vmem>>, vector<16x128xf32>,
    return
  }
  func.func @transform_0(%arg0: i32) -> (i32, i32) {
    %c0_i32 = arith.constant 0 : i32
    %c0_i32_0 = arith.constant 0 : i32
    return %c0_i32, %arg0 : i32, i32
  }
  func.func @transform_1(%arg0: i32) -> (i32, i32) {
    %c0_i32 = arith.constant 0 : i32
    %c0_i32_0 = arith.constant 0 : i32
    %c0_i32_1 = arith.constant 0 : i32
    return %c0_i32, %c0_i32_0 : i32, i32
  }
  func.func @transform_2(%arg0: i32) -> (i32, i32) {
    %c0_i32 = arith.constant 0 : i32
    %c0_i32_0 = arith.constant 0 : i32
    %c0_i32_1 = arith.constant 0 : i32
    return %c0_i32, %c0_i32_0 : i32, i32
  }
  func.func @transform_3(%arg0: i32) -> (i32, i32) {
    %c0_i32 = arith.constant 0 : i32
    %c0_i32_0 = arith.constant 0 : i32
    %c0_i32_1 = arith.constant 0 : i32
    return %c0_i32, %c0_i32_0 : i32, i32
  }
  func.func @transform_4(%arg0: i32) -> (i32, i32) {
    %c0_i32 = arith.constant 0 : i32
    %c0_i32_0 = arith.constant 0 : i32
    %c0_i32_1 = arith.constant 0 : i32
    return %c0_i32, %c0_i32_0 : i32, i32
  }
  func.func @transform_5(%arg0: i32) -> (i32, i32) {
    %c0_i32 = arith.constant 0 : i32
    %c0_i32_0 = arith.constant 0 : i32
    return %c0_i32, %arg0 : i32, i32
  }
}

</mosaic_0001>

<llo_original>
// kernel: tpu_custom_call.1
$region0: #{tpu_custom_call.1}
  #allocation0 [shape = 'u32[]', space=smem, size = 0x4, offset = 0x4, fixed_abs, tag = 'smem constant byte address 0x4 - core index']
  #allocation1 [shape = 'u32[144,128]{1,0:T(1,128)}', space=vmem, size = 0x12000, scoped, tag = 'internal scratch']
  %s0 = inlined_call_operand.vmem [shape: f32[8,128], index: 0, kind: input, shape index: {}]
  %s1 = inlined_call_operand.vmem [shape: f32[32,8], index: 1, kind: input, shape index: {}]
  %s2 = inlined_call_operand.vmem [shape: f32[32,1], index: 2, kind: input, shape index: {}]
  %s3 = inlined_call_operand.vmem [shape: f32[16,32], index: 3, kind: input, shape index: {}]
  %s4 = inlined_call_operand.vmem [shape: f32[16,1], index: 4, kind: input, shape index: {}]
  %s5 = inlined_call_operand.hbm [shape: f32[16,128], index: 5, kind: output, shape index: {}]
  %s6 = sld [smem:[#allocation0]]
  $region30: #{tpu_custom_call.1} parent=0
    _
  %s8 = ssub.s32 1, %s6
  %s9 = scalar_select 0, %s8, %s6
  $region1: #{tpu_custom_call.1} parent=0
    #allocation2 [shape = 'u8[8192]{0}', space=vmem, size = 0x2000, scoped, tag = 'output window, operand 0, single buffered']
    #allocation3 [shape = 's32[1]{0}', space=sflag, size = 0x4, scoped, tag = 'scoped memory for tpu_custom_call.1']
    %10 = vsyncpa [#allocation3], 0
    // Predicated region
    $region2: #{tpu_custom_call.1} parent=1 // pred_check
      _
    $region3: #{tpu_custom_call.1} parent=1 // pred_check_branch
      %12 = sbr.rel (0) target = $region5
    $region4: #{tpu_custom_call.1} parent=1 // pred_region
      _
    $region5: #{tpu_custom_call.1} parent=1 // pred_fallthru
      _
    // Predicated region
    $region6: #{tpu_custom_call.1} parent=1 // pred_check
      _
    $region7: #{tpu_custom_call.1} parent=1 // pred_check_branch
      %14 = sbr.rel (0) target = $region9
    $region8: #{tpu_custom_call.1} parent=1 // pred_region
      _
    $region9: #{tpu_custom_call.1} parent=1 // pred_fallthru
      _
    // Predicated region
    $region10: #{tpu_custom_call.1} parent=1 // pred_check
      _
    $region11: #{tpu_custom_call.1} parent=1 // pred_check_branch
      %16 = sbr.rel (0) target = $region13
    $region12: #{tpu_custom_call.1} parent=1 // pred_region
      _
    $region13: #{tpu_custom_call.1} parent=1 // pred_fallthru
      _
    // Predicated region
    $region14: #{tpu_custom_call.1} parent=1 // pred_check
      _
    $region15: #{tpu_custom_call.1} parent=1 // pred_check_branch
      %18 = sbr.rel (0) target = $region17
    $region16: #{tpu_custom_call.1} parent=1 // pred_region
      _
    $region17: #{tpu_custom_call.1} parent=1 // pred_fallthru
      _
    // Predicated region
    $region18: #{tpu_custom_call.1} parent=1 // pred_check
      _
    $region19: #{tpu_custom_call.1} parent=1 // pred_check_branch
      %20 = sbr.rel (0) target = $region21
    $region20: #{tpu_custom_call.1} parent=1 // pred_region
      _
    $region21: #{tpu_custom_call.1} parent=1 // pred_fallthru
      _
    %v21 = vld [vmem:[%s0] sm:$0xff]
    %v22 = vld [vmem:[%s1] sm:$0xff]
    %v23 = vld [vmem:[%s1 + $0x8] sm:$0xff]
    %v24 = vld [vmem:[%s1 + $0x10] sm:$0xff]
    %v25 = vld [vmem:[%s1 + $0x18] sm:$0xff]
    %v26 = vld [vmem:[%s2] sm:$0xff]
    %v27 = vld [vmem:[%s2 + $0x8] sm:$0xff]
    %v28 = vld [vmem:[%s2 + $0x10] sm:$0xff]
    %v29 = vld [vmem:[%s2 + $0x18] sm:$0xff]
    %31 = vset.pattern.permute.xlu0 0
    %32 = vperm.xlu0 %31, %v26
    %v33 = vpop.permute.xlu0 %32
    %36 = vset.pattern.permute.xlu0 0
    %37 = vperm.xlu0 %36, %v27
    %v38 = vpop.permute.xlu0 %37
    %41 = vset.pattern.permute.xlu0 0
    %42 = vperm.xlu0 %41, %v28
    %v43 = vpop.permute.xlu0 %42
    %46 = vset.pattern.permute.xlu0 0
    %47 = vperm.xlu0 %46, %v29
    %v48 = vpop.permute.xlu0 %47
    %vm50 = vcmask 64512
    %v52 = vsel %vm50, %v22, 0
    %v55 = vsel %vm50, %v23, 0
    %v58 = vsel %vm50, %v24, 0
    %v61 = vsel %vm50, %v25, 0
    %63 = vmatprep.subr.mxu0 0.0
    %64 = vmatpush1.msra.mxu0 %v21
    %65 = vmatprep.subr.mxu0 0.0
    %66 = vmatpush1.msra.mxu0 0.0
    %67 = vmatprep.subr.mxu0 0.0
    %68 = vmatpush1.msra.mxu0 0.0
    %69 = vmatprep.subr.mxu0 0.0
    %70 = vmatpush1.msra.mxu0 0.0
    %71 = vmatprep.subr.mxu0 0.0
    %72 = vmatpush1.msra.mxu0 0.0
    %73 = vmatprep.subr.mxu0 0.0
    %74 = vmatpush1.msra.mxu0 0.0
    %75 = vmatprep.subr.mxu0 0.0
    %76 = vmatpush1.msra.mxu0 0.0
    %77 = vmatprep.subr.mxu0 0.0
    %78 = vmatpush1.msra.mxu0 0.0
    %79 = vmatprep.subr.mxu0 0.0
    %80 = vmatpush1.msra.mxu0 0.0
    %81 = vmatprep.subr.mxu0 0.0
    %82 = vmatpush1.msra.mxu0 0.0
    %83 = vmatprep.subr.mxu0 0.0
    %84 = vmatpush1.msra.mxu0 0.0
    %85 = vmatprep.subr.mxu0 0.0
    %86 = vmatpush1.msra.mxu0 0.0
    %87 = vmatprep.subr.mxu0 0.0
    %88 = vmatpush1.msra.mxu0 0.0
    %89 = vmatprep.subr.mxu0 0.0
    %90 = vmatpush1.msra.mxu0 0.0
    %91 = vmatprep.subr.mxu0 0.0
    %92 = vmatpush1.msra.mxu0 0.0
    %93 = vmatprep.subr.mxu0 0.0
    %94 = vmatpush1.msra.mxu0 0.0
    %95 = vmatprep.subr.mxu0 0.0
    %96 = vmatpush1.msra.mxu0 0.0
    %97 = vmatprep.subr.mxu0 0.0
    %98 = vmatpush1.msra.mxu0 0.0
    %99 = vmatprep.subr.mxu0 0.0
    %100 = vmatpush1.msra.mxu0 0.0
    %101 = vmatprep.subr.mxu0 0.0
    %102 = vmatpush1.msra.mxu0 0.0
    %103 = vmatprep.subr.mxu0 0.0
    %104 = vmatpush1.msra.mxu0 0.0
    %105 = vmatprep.subr.mxu0 0.0
    %106 = vmatpush1.msra.mxu0 0.0
    %107 = vmatprep.subr.mxu0 0.0
    %108 = vmatpush1.msra.mxu0 0.0
    %109 = vmatprep.subr.mxu0 0.0
    %110 = vmatpush1.msra.mxu0 0.0
    %111 = vmatprep.subr.mxu0 0.0
    %112 = vmatpush1.msra.mxu0 0.0
    %113 = vmatprep.subr.mxu0 0.0
    %114 = vmatpush1.msra.mxu0 0.0
    %115 = vmatprep.subr.mxu0 0.0
    %116 = vmatpush1.msra.mxu0 0.0
    %117 = vmatprep.subr.mxu0 0.0
    %118 = vmatpush1.msra.mxu0 0.0
    %119 = vmatprep.subr.mxu0 0.0
    %120 = vmatpush1.msra.mxu0 0.0
    %121 = vmatprep.subr.mxu0 0.0
    %122 = vmatpush1.msra.mxu0 0.0
    %123 = vmatprep.subr.mxu0 0.0
    %124 = vmatpush1.msra.mxu0 0.0
    %125 = vmatprep.subr.mxu0 0.0
    %126 = vmatpush1.msra.mxu0 0.0
    %127 = vmatprep.mubr.f32.mxu0 0.0
    %128 = vmatmul.mubr.f32.gmra.mrb[0].mxu0 %v52
    %v129 = vpop.f32.mrb[0].mxu0
    %v130 = vadd.f32 %v33, %v129
    %v131 = vpop.f32.mrb[0].mxu0
    %132 = vmatprep.mubr.f32.mxu0 0.0
    %133 = vmatmul.mubr.f32.gmra.mrb[0].mxu0 %v55
    %v134 = vpop.f32.mrb[0].mxu0
    %v135 = vadd.f32 %v38, %v134
    %v136 = vpop.f32.mrb[0].mxu0
    %137 = vmatprep.mubr.f32.mxu0 0.0
    %138 = vmatmul.mubr.f32.gmra.mrb[0].mxu0 %v58
    %v139 = vpop.f32.mrb[0].mxu0
    %v140 = vadd.f32 %v43, %v139
    %v141 = vpop.f32.mrb[0].mxu0
    %142 = vmatprep.mubr.f32.mxu0 0.0
    %143 = vmatmul.mubr.f32.gmra.mrb[0].mxu0 %v61
    %v144 = vpop.f32.mrb[0].mxu0
    %v145 = vadd.f32 %v48, %v144
    %v146 = vpop.f32.mrb[0].mxu0
    %147 = vdwg.mxu0
    %v148 = vmax.f32 %v130, 0.0
    %v149 = vmax.f32 %v135, 0.0
    %v150 = vmax.f32 %v140, 0.0
    %v151 = vmax.f32 %v145, 0.0
    %v152 = vld [vmem:[%s3] sm:$0xff]
    %v153 = vld [vmem:[%s3 + $0x8] sm:$0xff]
    %v154 = vld [vmem:[%s4] sm:$0xff]
    %v155 = vld [vmem:[%s4 + $0x8] sm:$0xff]
    %157 = vset.pattern.permute.xlu0 0
    %158 = vperm.xlu0 %157, %v154
    %v159 = vpop.permute.xlu0 %158
    %162 = vset.pattern.permute.xlu0 0
    %163 = vperm.xlu0 %162, %v155
    %v164 = vpop.permute.xlu0 %163
    %vm166 = vcmask 261120
    %v168 = vsel %vm166, %v152, 0
    %v171 = vsel %vm166, %v153, 0
    %173 = vmatprep.subr.mxu0 0.0
    %174 = vmatpush1.msra.mxu0 %v148
    %175 = vmatprep.subr.mxu0 0.0
    %176 = vmatpush1.msra.mxu0 %v149
    %177 = vmatprep.subr.mxu0 0.0
    %178 = vmatpush1.msra.mxu0 %v150
    %179 = vmatprep.subr.mxu0 0.0
    %180 = vmatpush1.msra.mxu0 %v151
    %181 = vmatprep.subr.mxu0 0.0
    %182 = vmatpush1.msra.mxu0 0.0
    %183 = vmatprep.subr.mxu0 0.0
    %184 = vmatpush1.msra.mxu0 0.0
    %185 = vmatprep.subr.mxu0 0.0
    %186 = vmatpush1.msra.mxu0 0.0
    %187 = vmatprep.subr.mxu0 0.0
    %188 = vmatpush1.msra.mxu0 0.0
    %189 = vmatprep.subr.mxu0 0.0
    %190 = vmatpush1.msra.mxu0 0.0
    %191 = vmatprep.subr.mxu0 0.0
    %192 = vmatpush1.msra.mxu0 0.0
    %193 = vmatprep.subr.mxu0 0.0
    %194 = vmatpush1.msra.mxu0 0.0
    %195 = vmatprep.subr.mxu0 0.0
    %196 = vmatpush1.msra.mxu0 0.0
    %197 = vmatprep.subr.mxu0 0.0
    %198 = vmatpush1.msra.mxu0 0.0
    %199 = vmatprep.subr.mxu0 0.0
    %200 = vmatpush1.msra.mxu0 0.0
    %201 = vmatprep.subr.mxu0 0.0
    %202 = vmatpush1.msra.mxu0 0.0
    %203 = vmatprep.subr.mxu0 0.0
    %204 = vmatpush1.msra.mxu0 0.0
    %205 = vmatprep.subr.mxu0 0.0
    %206 = vmatpush1.msra.mxu0 0.0
    %207 = vmatprep.subr.mxu0 0.0
    %208 = vmatpush1.msra.mxu0 0.0
    %209 = vmatprep.subr.mxu0 0.0
    %210 = vmatpush1.msra.mxu0 0.0
    %211 = vmatprep.subr.mxu0 0.0
    %212 = vmatpush1.msra.mxu0 0.0
    %213 = vmatprep.subr.mxu0 0.0
    %214 = vmatpush1.msra.mxu0 0.0
    %215 = vmatprep.subr.mxu0 0.0
    %216 = vmatpush1.msra.mxu0 0.0
    %217 = vmatprep.subr.mxu0 0.0
    %218 = vmatpush1.msra.mxu0 0.0
    %219 = vmatprep.subr.mxu0 0.0
    %220 = vmatpush1.msra.mxu0 0.0
    %221 = vmatprep.subr.mxu0 0.0
    %222 = vmatpush1.msra.mxu0 0.0
    %223 = vmatprep.subr.mxu0 0.0
    %224 = vmatpush1.msra.mxu0 0.0
    %225 = vmatprep.subr.mxu0 0.0
    %226 = vmatpush1.msra.mxu0 0.0
    %227 = vmatprep.subr.mxu0 0.0
    %228 = vmatpush1.msra.mxu0 0.0
    %229 = vmatprep.subr.mxu0 0.0
    %230 = vmatpush1.msra.mxu0 0.0
    %231 = vmatprep.subr.mxu0 0.0
    %232 = vmatpush1.msra.mxu0 0.0
    %233 = vmatprep.subr.mxu0 0.0
    %234 = vmatpush1.msra.mxu0 0.0
    %235 = vmatprep.subr.mxu0 0.0
    %236 = vmatpush1.msra.mxu0 0.0
    %237 = vmatprep.mubr.f32.mxu0 0.0
    %238 = vmatmul.mubr.f32.gmra.mrb[0].mxu0 %v168
    %v239 = vpop.f32.mrb[0].mxu0
    %v240 = vadd.f32 %v159, %v239
    %v241 = vpop.f32.mrb[0].mxu0
    %242 = vmatprep.mubr.f32.mxu0 0.0
    %243 = vmatmul.mubr.f32.gmra.mrb[0].mxu0 %v171
    %v244 = vpop.f32.mrb[0].mxu0
    %v245 = vadd.f32 %v164, %v244
    %v246 = vpop.f32.mrb[0].mxu0
    %247 = vdwg.mxu0
    %v248 = vtanh.pop %v240
    %v249 = vtanh.pop %v245
    %250 = vst [vmem:[#allocation2] sm:$0xff] %v248
    %251 = vst [vmem:[#allocation2 + $0x8] sm:$0xff] %v249
    // Predicated region
    $region22: #{tpu_custom_call.1} parent=1 // pred_check
      _
    $region23: #{tpu_custom_call.1} parent=1 // pred_check_branch
      %253 = sbr.rel (0) target = $region25
    $region24: #{tpu_custom_call.1} parent=1 // pred_region
      %s255 = ssub.s32 256, 256
      %256 = vsyncadd [#allocation3], %s255
      %s257 = sshll.u32 [#allocation2], 4
      %s258 = int_to_ptr.vmem [resolvable:$true] %s257
      %263 = dma.vmem_to_hbm [thread:$0]  %s258, 256, %s5, [#allocation3], 128, 128, 8
    $region25: #{tpu_custom_call.1} parent=1 // pred_fallthru
      _
    // Predicated region
    $region26: #{tpu_custom_call.1} parent=1 // pred_check
      _
    $region27: #{tpu_custom_call.1} parent=1 // pred_check_branch
      %265 = sbr.rel (0) target = $region29
    $region28: #{tpu_custom_call.1} parent=1 // pred_region
      %266 = dma.done [#allocation3], 256
    $region29: #{tpu_custom_call.1} parent=1 // pred_fallthru
      _
    %267 = vsyncpa [#allocation3], 1

</llo_original>
